<compile_context>
chip_gen: v7x
topology: tpu7x:2x2x1
jax: 0.10.0
libtpu: 0.0.40
codegen_flags: <defaults>
</compile_context>

<pallas_src>
import functools

import jax
import jax.numpy as jnp
from jax.experimental import pallas as pl
from jax.experimental.pallas import tpu as pltpu


def _aux_head_kernel(x_ref, w1_ref, b1_ref, w2_ref, b2_ref, o_ref, acc_ref,
                     *, inv_hw, hw_total, hw_tile, mask_tail):
    """One (batch-tile, spatial-tile) grid step.

    x_ref : (TN, C, hw_tile)   activation slab (streamed, double-buffered)
    w1/b1 : (C, H1), (1, H1)   VMEM-resident
    w2/b2 : (H1, NCp), (1, NCp)VMEM-resident (NCp = num_class padded to 128)
    o_ref : (TN, NCp)          written only on the last spatial step
    acc_ref: (TN, C) f32       raw spatial-sum accumulator (scratch)
    """
    k = pl.program_id(1)
    n_k = pl.num_programs(1)

    @pl.when(k == 0)
    def _init():
        acc_ref[...] = jnp.zeros_like(acc_ref)

    # Global-average-pool partial: accumulate raw sums in f32 (scale hoisted
    # to finalize). Cast to f32 first (required on v5e, cheap elsewhere).
    x = x_ref[...].astype(jnp.float32)                      # (TN, C, hw_tile)
    if mask_tail:
        # Final spatial tile may read past H*W (padded block): zero it out.
        s = jax.lax.broadcasted_iota(jnp.int32, x.shape, dimension=2) + k * hw_tile
        x = jnp.where(s < hw_total, x, 0.0)
    acc_ref[...] += jnp.sum(x, axis=-1)                     # (TN, C)

    @pl.when(k == n_k - 1)
    def _finalize():
        pooled = acc_ref[...] * jnp.float32(inv_hw)          # mean == sum / (H*W)
        # Linear(C, 128) + ReLU  (MXU, f32 accumulate)
        h = jnp.dot(pooled, w1_ref[...],
                    preferred_element_type=jnp.float32) + b1_ref[...]
        h = jnp.maximum(h, 0.0)
        # Linear(128, num_class_padded)
        out = jnp.dot(h, w2_ref[...],
                      preferred_element_type=jnp.float32) + b2_ref[...]
        o_ref[...] = out.astype(o_ref.dtype)


def aux_classifier_forward(x_nchw, w1, b1, w2, b2):
    """x_nchw: (N, C, H, W) (f32 or bf16). Returns (N, num_class) f32.

    Weights are stored as (fan_in, fan_out) so the kernel computes x @ W
    (== x @ W_torch.T).
    """
    N, C, H, W = x_nchw.shape
    HW = H * W
    hidden = w1.shape[1]
    num_class = w2.shape[1]

    # --- lane-dense output: pad num_class up to a multiple of 128 -----------
    nc_pad = max(128, pl.cdiv(num_class, 128) * 128)
    if nc_pad != num_class:
        w2 = jnp.pad(w2, ((0, 0), (0, nc_pad - num_class)))
        b2 = jnp.pad(b2, (0, nc_pad - num_class))

    x_flat = x_nchw.reshape(N, C, HW)
    itemsize = jnp.dtype(x_nchw.dtype).itemsize

    # --- tile selection ------------------------------------------------------
    # Batch tile: full batch when small, else 128 (MXU-friendly, multiple of 8).
    TN = N if N <= 128 else 128
    # Spatial tile: largest lane-aligned tile whose buffer stays under
    # ~12 MiB (x is double-buffered => <=24 MiB, safe even for v7x's 64 MiB).
    X_TILE_BUDGET = 12 * 1024 * 1024
    max_hw = max(128, X_TILE_BUDGET // max(1, TN * C * itemsize))
    if max_hw >= HW:
        hw_tile = HW                       # single spatial step, full extent
    else:
        hw_tile = (max_hw // 128) * 128    # multiple of 128 (lane aligned)
    n_hw = pl.cdiv(HW, hw_tile)
    mask_tail = (HW % hw_tile) != 0

    grid = (pl.cdiv(N, TN), n_hw)          # reduction (spatial) axis last

    kernel = functools.partial(
        _aux_head_kernel,
        inv_hw=1.0 / float(HW),
        hw_total=HW,
        hw_tile=hw_tile,
        mask_tail=mask_tail,
    )

    out_padded = pl.pallas_call(
        kernel,
        out_shape=jax.ShapeDtypeStruct((N, nc_pad), jnp.float32),
        grid_spec=pltpu.PrefetchScalarGridSpec(
            num_scalar_prefetch=0,
            grid=grid,
            in_specs=[
                # x: streamed batch x spatial tiles
                pl.BlockSpec((TN, C, hw_tile), lambda i, k: (i, 0, k)),
                # weights/biases: constant block index -> VMEM-resident
                pl.BlockSpec((C, hidden), lambda i, k: (0, 0)),
                pl.BlockSpec((1, hidden), lambda i, k: (0, 0)),
                pl.BlockSpec((hidden, nc_pad), lambda i, k: (0, 0)),
                pl.BlockSpec((1, nc_pad), lambda i, k: (0, 0)),
            ],
            out_specs=pl.BlockSpec((TN, nc_pad), lambda i, k: (i, 0)),
            scratch_shapes=[pltpu.VMEM((TN, C), jnp.float32)],
        ),
        compiler_params=pltpu.CompilerParams(
            dimension_semantics=("parallel", "arbitrary"),
            vmem_limit_bytes=48 * 1024 * 1024,   # headroom; < v7x 64 MiB physical
        ),
    )(x_flat, w1, b1.reshape(1, hidden), w2, b2.reshape(1, nc_pad))

    if nc_pad != num_class:
        out_padded = out_padded[:, :num_class]
    return out_padded


def _init_linear(key, fan_in, fan_out):
    """Deterministic init mimicking torch.nn.Linear defaults
    (kaiming_uniform(a=sqrt(5)) -> U(-1/sqrt(fan_in), 1/sqrt(fan_in)))."""
    kw, kb = jax.random.split(key)
    bound = 1.0 / jnp.sqrt(jnp.float32(fan_in))
    # Stored as (fan_in, fan_out) so the kernel computes x @ W (== x @ W_torch.T).
    w = jax.random.uniform(kw, (fan_in, fan_out), jnp.float32, -bound, bound)
    b = jax.random.uniform(kb, (fan_out,), jnp.float32, -bound, bound)
    return w, b


def reference_forward(x_nchw, w1, b1, w2, b2):
    pooled = jnp.mean(x_nchw, axis=(2, 3))              # (N, C)
    h = jnp.maximum(pooled @ w1 + b1, 0.0)
    return h @ w2 + b2


if __name__ == "__main__":
    # Small shapes consistent with the module: act_size = (N, C, H, W), num_class
    N, C, H, W = 2, 4, 16, 16
    num_class = 10
    hidden = 128

    key = jax.random.PRNGKey(0)
    kx, k1, k2 = jax.random.split(key, 3)

    x = jax.random.normal(kx, (N, C, H, W), jnp.float32)
    w1, b1 = _init_linear(k1, C, hidden)          # Linear(act_size[1], 128)
    w2, b2 = _init_linear(k2, hidden, num_class)  # Linear(128, num_class)

    out = aux_classifier_forward(x, w1, b1, w2, b2)
    out = jax.block_until_ready(out)

    ref = reference_forward(x, w1, b1, w2, b2)
    assert out.shape == (N, num_class)
    assert jnp.allclose(out, ref, atol=1e-5, rtol=1e-5), "mismatch vs JAX reference"

    print("KERNEL_OK")
</pallas_src>

<mosaic_0001>
module attributes {stable_mosaic.version = 11 : i64} {
  func.func @_aux_head_kernel(%arg0: i32, %arg1: i32, %arg2: memref<2x4x256xf32, #tpu.memory_space<vmem>>, %arg3: memref<4x128xf32, #tpu.memory_space<vmem>>, %arg4: memref<1x128xf32, #tpu.memory_space<vmem>>, %arg5: memref<128x128xf32, #tpu.memory_space<vmem>>, %arg6: memref<1x128xf32, #tpu.memory_space<vmem>>, %arg7: memref<2x128xf32, #tpu.memory_space<vmem>>, %arg8: memref<2x4xf32, #tpu.memory_space<vmem>>) attributes {dimension_semantics = [#tpu.dimension_semantics<parallel>, #tpu.dimension_semantics<arbitrary>], iteration_bounds = array<i64: 1, 1>, scalar_prefetch = 0 : i64, scratch_operands = 1 : i64, tpu.core_type = #tpu.core_type<tc>, window_params = [{transform_indices = @transform_0, window_bounds = array<i64: 2, 4, 256>}, {pipeline_mode = #tpu.pipeline_mode<synchronous>, transform_indices = @transform_1, window_bounds = array<i64: 4, 128>}, {pipeline_mode = #tpu.pipeline_mode<synchronous>, transform_indices = @transform_2, window_bounds = array<i64: 1, 128>}, {pipeline_mode = #tpu.pipeline_mode<synchronous>, transform_indices = @transform_3, window_bounds = array<i64: 128, 128>}, {pipeline_mode = #tpu.pipeline_mode<synchronous>, transform_indices = @transform_4, window_bounds = array<i64: 1, 128>}, {transform_indices = @transform_5, window_bounds = array<i64: 2, 128>}]} {
    %c0_i32 = arith.constant 0 : i32
    %0 = arith.cmpi eq, %arg1, %c0_i32 : i32
    %1 = arith.extui %0 : i1 to i32
    %c0_i32_0 = arith.constant 0 : i32
    %2 = arith.cmpi ne, %1, %c0_i32_0 : i32
    scf.if %2 {
      %cst_9 = arith.constant 0.000000e+00 : f32
      %11 = vector.broadcast %cst_9 : f32 to vector<2x4xf32>
      %c0_10 = arith.constant 0 : index
      %c0_11 = arith.constant 0 : index
      %12 = vector.load %arg8[%c0_10, %c0_11] : memref<2x4xf32, #tpu.memory_space<vmem>>, vector<2x4xf32>
      tpu.vector_store %arg8[%c0_10, %c0_11], %11 {strides = array<i32>} : memref<2x4xf32, #tpu.memory_space<vmem>>, vector<2x4xf32>,
    } else {
    }
    %c0 = arith.constant 0 : index
    %c0_1 = arith.constant 0 : index
    %c0_2 = arith.constant 0 : index
    %3 = vector.load %arg2[%c0, %c0_1, %c0_2] : memref<2x4x256xf32, #tpu.memory_space<vmem>>, vector<2x4x256xf32>
    %c0_3 = arith.constant 0 : index
    %c0_4 = arith.constant 0 : index
    %4 = vector.load %arg8[%c0_3, %c0_4] : memref<2x4xf32, #tpu.memory_space<vmem>>, vector<2x4xf32>
    %cst = arith.constant dense<0.000000e+00> : vector<2x4xf32>
    %5 = vector.multi_reduction <add>, %3, %cst [2] : vector<2x4x256xf32> to vector<2x4xf32>
    %6 = arith.addf %4, %5 : vector<2x4xf32>
    %c0_5 = arith.constant 0 : index
    %c0_6 = arith.constant 0 : index
    %7 = vector.load %arg8[%c0_5, %c0_6] : memref<2x4xf32, #tpu.memory_space<vmem>>, vector<2x4xf32>
    tpu.vector_store %arg8[%c0_5, %c0_6], %6 {strides = array<i32>} : memref<2x4xf32, #tpu.memory_space<vmem>>, vector<2x4xf32>,
    %c0_i32_7 = arith.constant 0 : i32
    %8 = arith.cmpi eq, %arg1, %c0_i32_7 : i32
    %9 = arith.extui %8 : i1 to i32
    %c0_i32_8 = arith.constant 0 : i32
    %10 = arith.cmpi ne, %9, %c0_i32_8 : i32
    scf.if %10 {
      %c0_9 = arith.constant 0 : index
      %c0_10 = arith.constant 0 : index
      %11 = vector.load %arg8[%c0_9, %c0_10] : memref<2x4xf32, #tpu.memory_space<vmem>>, vector<2x4xf32>
      %cst_11 = arith.constant 3.906250e-03 : f32
      %12 = vector.broadcast %cst_11 : f32 to vector<2x4xf32>
      %13 = arith.mulf %11, %12 : vector<2x4xf32>
      %c0_12 = arith.constant 0 : index
      %c0_13 = arith.constant 0 : index
      %14 = vector.load %arg3[%c0_12, %c0_13] : memref<4x128xf32, #tpu.memory_space<vmem>>, vector<4x128xf32>
      %cst_14 = arith.constant dense<0.000000e+00> : vector<2x128xf32>
      %15 = tpu.matmul %13, %14, %cst_14 {dimension_numbers = #tpu.dot_dimension_numbers<[1], [0], [0], [1], [0, 0, 1, 1], [], []>} : vector<2x4xf32>, vector<4x128xf32>, vector<2x128xf32> -> vector<2x128xf32>
      %c0_15 = arith.constant 0 : index
      %c0_16 = arith.constant 0 : index
      %16 = vector.load %arg4[%c0_15, %c0_16] : memref<1x128xf32, #tpu.memory_space<vmem>>, vector<1x128xf32>
      %17 = vector.broadcast %16 : vector<1x128xf32> to vector<2x128xf32>
      %18 = arith.addf %15, %17 : vector<2x128xf32>
      %cst_17 = arith.constant 0.000000e+00 : f32
      %19 = vector.broadcast %cst_17 : f32 to vector<2x128xf32>
      %20 = arith.maximumf %18, %19 : vector<2x128xf32>
      %c0_18 = arith.constant 0 : index
      %c0_19 = arith.constant 0 : index
      %21 = vector.load %arg5[%c0_18, %c0_19] : memref<128x128xf32, #tpu.memory_space<vmem>>, vector<128x128xf32>
      %cst_20 = arith.constant dense<0.000000e+00> : vector<2x128xf32>
      %22 = tpu.matmul %20, %21, %cst_20 {dimension_numbers = #tpu.dot_dimension_numbers<[1], [0], [0], [1], [0, 0, 1, 1], [], []>} : vector<2x128xf32>, vector<128x128xf32>, vector<2x128xf32> -> vector<2x128xf32>
      %c0_21 = arith.constant 0 : index
      %c0_22 = arith.constant 0 : index
      %23 = vector.load %arg6[%c0_21, %c0_22] : memref<1x128xf32, #tpu.memory_space<vmem>>, vector<1x128xf32>
      %24 = vector.broadcast %23 : vector<1x128xf32> to vector<2x128xf32>
      %25 = arith.addf %22, %24 : vector<2x128xf32>
      %c0_23 = arith.constant 0 : index
      %c0_24 = arith.constant 0 : index
      %26 = vector.load %arg7[%c0_23, %c0_24] : memref<2x128xf32, #tpu.memory_space<vmem>>, vector<2x128xf32>
      tpu.vector_store %arg7[%c0_23, %c0_24], %25 {strides = array<i32>} : memref<2x128xf32, #tpu.memory_space<vmem>>, vector<2x128xf32>,
    } else {
    }
    return
  }
  func.func @transform_0(%arg0: i32, %arg1: i32) -> (i32, i32, i32) {
    %c0_i32 = arith.constant 0 : i32
    %c0_i32_0 = arith.constant 0 : i32
    return %arg0, %c0_i32, %arg1 : i32, i32, i32
  }
  func.func @transform_1(%arg0: i32, %arg1: i32) -> (i32, i32) {
    %c0_i32 = arith.constant 0 : i32
    %c0_i32_0 = arith.constant 0 : i32
    %c0_i32_1 = arith.constant 0 : i32
    return %c0_i32, %c0_i32_0 : i32, i32
  }
  func.func @transform_2(%arg0: i32, %arg1: i32) -> (i32, i32) {
    %c0_i32 = arith.constant 0 : i32
    %c0_i32_0 = arith.constant 0 : i32
    %c0_i32_1 = arith.constant 0 : i32
    return %c0_i32, %c0_i32_0 : i32, i32
  }
  func.func @transform_3(%arg0: i32, %arg1: i32) -> (i32, i32) {
    %c0_i32 = arith.constant 0 : i32
    %c0_i32_0 = arith.constant 0 : i32
    %c0_i32_1 = arith.constant 0 : i32
    return %c0_i32, %c0_i32_0 : i32, i32
  }
  func.func @transform_4(%arg0: i32, %arg1: i32) -> (i32, i32) {
    %c0_i32 = arith.constant 0 : i32
    %c0_i32_0 = arith.constant 0 : i32
    %c0_i32_1 = arith.constant 0 : i32
    return %c0_i32, %c0_i32_0 : i32, i32
  }
  func.func @transform_5(%arg0: i32, %arg1: i32) -> (i32, i32) {
    %c0_i32 = arith.constant 0 : i32
    %c0_i32_0 = arith.constant 0 : i32
    return %arg0, %c0_i32 : i32, i32
  }
}

</mosaic_0001>

<llo_original>
// kernel: tpu_custom_call.1
$region0: #{tpu_custom_call.1}
  #allocation0 [shape = 'u32[]', space=smem, size = 0x4, offset = 0x4, fixed_abs, tag = 'smem constant byte address 0x4 - core index']
  #allocation1 [shape = 'u32[144,128]{1,0:T(1,128)}', space=vmem, size = 0x12000, scoped, tag = 'internal scratch']
  #allocation2 [shape = 'f32[2,4]{1,0:T(2,128)}', space=vmem, size = 0x400, scoped, tag = 'scratch operand']
  %s0 = inlined_call_operand.hbm [shape: f32[2,4,256], index: 0, kind: input, shape index: {}]
  %s1 = inlined_call_operand.hbm [shape: f32[4,128], index: 1, kind: input, shape index: {}]
  %s2 = inlined_call_operand.vmem [shape: f32[1,128], index: 2, kind: input, shape index: {}]
  %s3 = inlined_call_operand.hbm [shape: f32[128,128], index: 3, kind: input, shape index: {}]
  %s4 = inlined_call_operand.vmem [shape: f32[1,128], index: 4, kind: input, shape index: {}]
  %s5 = inlined_call_operand.hbm [shape: f32[2,128], index: 5, kind: output, shape index: {}]
  %s6 = sld [smem:[#allocation0]]
  $region50: #{tpu_custom_call.1} parent=0
    _
  %s8 = ssub.s32 1, %s6
  %s9 = scalar_select 0, %s8, %s6
  $region1: #{tpu_custom_call.1} parent=0
    #allocation3 [shape = 'u8[8192]{0}', space=vmem, size = 0x2000, scoped, tag = 'input window, operand 0, single buffered']
    #allocation4 [shape = 's32[1]{0}', space=sflag, size = 0x4, scoped, tag = 'scoped memory for tpu_custom_call.1']
    #allocation5 [shape = 's32[1]{0}', space=sflag, size = 0x4, scoped, tag = 'scoped memory for tpu_custom_call.1']
    #allocation6 [shape = 'u8[2048]{0}', space=vmem, size = 0x800, scoped, tag = 'input window, operand 1, single buffered']
    #allocation7 [shape = 's32[1]{0}', space=sflag, size = 0x4, scoped, tag = 'scoped memory for tpu_custom_call.1']
    #allocation8 [shape = 'u8[65536]{0}', space=vmem, size = 0x10000, scoped, tag = 'input window, operand 3, single buffered']
    #allocation9 [shape = 'u8[1024]{0}', space=vmem, size = 0x400, scoped, tag = 'output window, operand 0, single buffered']
    %10 = vsyncpa [#allocation4], 0
    %11 = vsyncpa [#allocation7], 0
    %12 = vsyncpa [#allocation5], 0
    // Predicated region
    $region2: #{tpu_custom_call.1} parent=1 // pred_check
      _
    $region3: #{tpu_custom_call.1} parent=1 // pred_check_branch
      %14 = sbr.rel (0) target = $region5
    $region4: #{tpu_custom_call.1} parent=1 // pred_region
      %s16 = ssub.s32 256, 256
      %17 = vsyncadd [#allocation4], %s16
      %s18 = sshll.u32 [#allocation3], 4
      %s19 = int_to_ptr.vmem [resolvable:$true] %s18
      %24 = dma.hbm_to_vmem [thread:$0]  %s0, 256, %s19, [#allocation4], 128, 128, 8
    $region5: #{tpu_custom_call.1} parent=1 // pred_fallthru
      _
    // Predicated region
    $region6: #{tpu_custom_call.1} parent=1 // pred_check
      _
    $region7: #{tpu_custom_call.1} parent=1 // pred_check_branch
      %26 = sbr.rel (0) target = $region9
    $region8: #{tpu_custom_call.1} parent=1 // pred_region
      %s28 = ssub.s32 64, 64
      %29 = vsyncadd [#allocation7], %s28
      %s31 = sshll.u32 [#allocation6], 4
      %s32 = int_to_ptr.vmem [resolvable:$true] %s31
      %34 = dma.hbm_to_vmem [thread:$0]  %s1, 64, %s32, [#allocation7]
    $region9: #{tpu_custom_call.1} parent=1 // pred_fallthru
      _
    // Predicated region
    $region10: #{tpu_custom_call.1} parent=1 // pred_check
      _
    $region11: #{tpu_custom_call.1} parent=1 // pred_check_branch
      %36 = sbr.rel (0) target = $region13
    $region12: #{tpu_custom_call.1} parent=1 // pred_region
      _
    $region13: #{tpu_custom_call.1} parent=1 // pred_fallthru
      _
    // Predicated region
    $region14: #{tpu_custom_call.1} parent=1 // pred_check
      _
    $region15: #{tpu_custom_call.1} parent=1 // pred_check_branch
      %38 = sbr.rel (0) target = $region17
    $region16: #{tpu_custom_call.1} parent=1 // pred_region
      %s40 = ssub.s32 2048, 2048
      %41 = vsyncadd [#allocation7], %s40
      %s42 = sshll.u32 [#allocation8], 4
      %s43 = int_to_ptr.vmem [resolvable:$true] %s42
      %48 = dma.hbm_to_vmem [thread:$0]  %s3, 2048, %s43, [#allocation7], 128, 128, 8
    $region17: #{tpu_custom_call.1} parent=1 // pred_fallthru
      _
    // Predicated region
    $region18: #{tpu_custom_call.1} parent=1 // pred_check
      _
    $region19: #{tpu_custom_call.1} parent=1 // pred_check_branch
      %50 = sbr.rel (0) target = $region21
    $region20: #{tpu_custom_call.1} parent=1 // pred_region
      _
    $region21: #{tpu_custom_call.1} parent=1 // pred_fallthru
      _
    // Predicated region
    $region22: #{tpu_custom_call.1} parent=1 // pred_check
      _
    $region23: #{tpu_custom_call.1} parent=1 // pred_check_branch
      %52 = sbr.rel (0) target = $region25
    $region24: #{tpu_custom_call.1} parent=1 // pred_region
      %53 = dma.done [#allocation4], 256
    $region25: #{tpu_custom_call.1} parent=1 // pred_fallthru
      _
    // Predicated region
    $region26: #{tpu_custom_call.1} parent=1 // pred_check
      _
    $region27: #{tpu_custom_call.1} parent=1 // pred_check_branch
      %55 = sbr.rel (0) target = $region29
    $region28: #{tpu_custom_call.1} parent=1 // pred_region
      %56 = dma.done [#allocation7], 64
    $region29: #{tpu_custom_call.1} parent=1 // pred_fallthru
      _
    // Predicated region
    $region30: #{tpu_custom_call.1} parent=1 // pred_check
      _
    $region31: #{tpu_custom_call.1} parent=1 // pred_check_branch
      %58 = sbr.rel (0) target = $region33
    $region32: #{tpu_custom_call.1} parent=1 // pred_region
      %59 = dma.done [#allocation7], 2048
    $region33: #{tpu_custom_call.1} parent=1 // pred_fallthru
      _
    %p60 = scmp.eq.s32.totalorder 0, 0
    // Predicated region
    $region34: #{tpu_custom_call.1} parent=1 // pred_check
      %p61 = pneg %p60
    $region35: #{tpu_custom_call.1} parent=1 // pred_check_branch
      %63 = sbr.rel (%p61) target = $region37
    $region36: #{tpu_custom_call.1} parent=1 // pred_region
      %vm64 = vcmask 25600
      %65 = vst.msk [vmem:[#allocation2] sm:$0x3] %vm64, 0.0
    $region37: #{tpu_custom_call.1} parent=1 // pred_fallthru
      _
    %v66 = vld [vmem:[#allocation3] sm:$0xff]
    %v67 = vld [vmem:[#allocation3 + $0x8] sm:$0xff]
    %v68 = vld [vmem:[#allocation2] sm:$0x3]
    %v71 = vcombine.high %v66, %v66
    %v72 = vcombine.high %v67, %v67
    %vm75 = vcmask 1043456
    %v76 = vsel %vm75, %v66, 0.0
    %v77 = vsel %vm75, %v71, 0.0
    %v78 = vadd.f32 %v76, %v77
    %79 = vadd.xlane.f32.xlu0 %v78
    %v80 = vpop.xlane.xlu0 %79
    %v81 = vsel %vm75, %v67, 0.0
    %v82 = vsel %vm75, %v72, 0.0
    %v83 = vadd.f32 %v81, %v82
    %84 = vadd.xlane.f32.xlu0 %v83
    %v85 = vpop.xlane.xlu0 %84
    %v88 = vlaneseq
    %v89 = vand.u32 %v88, 127
    %v90 = vlaneseq
    %v91 = vshrl.u32 %v90, 7
    %v92 = vsub.s32 %v89, %v91
    %v93 = vrot.slane %v80, %v92
    %v94 = vlaneseq
    %v95 = vshrl.u32 %v94, 7
    %v96 = vsub.s32 %v89, %v95
    %v97 = vrot.slane %v85, %v96
    %vm98 = vcmask 1041409
    %v99 = vsel %vm98, %v97, %v93
    %v101 = vadd.f32 %v68, %v99
    %vm102 = vcmask 25600
    %103 = vst.msk [vmem:[#allocation2] sm:$0x3] %vm102, %v101
    // Predicated region
    $region38: #{tpu_custom_call.1} parent=1 // pred_check
      %p104 = pneg %p60
    $region39: #{tpu_custom_call.1} parent=1 // pred_check_branch
      %106 = sbr.rel (%p104) target = $region41
    $region40: #{tpu_custom_call.1} parent=1 // pred_region
      %v107 = vld [vmem:[#allocation2] sm:$0x3]
      %v108 = vmul.f32 %v107, 0.00390625
      %v109 = vld [vmem:[#allocation6] sm:$0xf]
      %v110 = vld [vmem:[%s2] sm:$0x1]
      %v112 = vlaneseq
      %v113 = vshrl.u32 %v112, 7
      %v114 = vsub.s32 0, %v113
      %v115 = vrot.slane %v110, %v114
      %vm117 = vcmask 31744
      %v119 = vsel %vm117, %v108, 0
      %v122 = vsel %vm75, %v109, 0
      %124 = vmatprep.subr.mxu0 0.0
      %125 = vmatpush1.msra.mxu0 %v122
      %126 = vmatprep.subr.mxu0 0.0
      %127 = vmatpush1.msra.mxu0 0.0
      %128 = vmatprep.subr.mxu0 0.0
      %129 = vmatpush1.msra.mxu0 0.0
      %130 = vmatprep.subr.mxu0 0.0
      %131 = vmatpush1.msra.mxu0 0.0
      %132 = vmatprep.subr.mxu0 0.0
      %133 = vmatpush1.msra.mxu0 0.0
      %134 = vmatprep.subr.mxu0 0.0
      %135 = vmatpush1.msra.mxu0 0.0
      %136 = vmatprep.subr.mxu0 0.0
      %137 = vmatpush1.msra.mxu0 0.0
      %138 = vmatprep.subr.mxu0 0.0
      %139 = vmatpush1.msra.mxu0 0.0
      %140 = vmatprep.subr.mxu0 0.0
      %141 = vmatpush1.msra.mxu0 0.0
      %142 = vmatprep.subr.mxu0 0.0
      %143 = vmatpush1.msra.mxu0 0.0
      %144 = vmatprep.subr.mxu0 0.0
      %145 = vmatpush1.msra.mxu0 0.0
      %146 = vmatprep.subr.mxu0 0.0
      %147 = vmatpush1.msra.mxu0 0.0
      %148 = vmatprep.subr.mxu0 0.0
      %149 = vmatpush1.msra.mxu0 0.0
      %150 = vmatprep.subr.mxu0 0.0
      %151 = vmatpush1.msra.mxu0 0.0
      %152 = vmatprep.subr.mxu0 0.0
      %153 = vmatpush1.msra.mxu0 0.0
      %154 = vmatprep.subr.mxu0 0.0
      %155 = vmatpush1.msra.mxu0 0.0
      %156 = vmatprep.subr.mxu0 0.0
      %157 = vmatpush1.msra.mxu0 0.0
      %158 = vmatprep.subr.mxu0 0.0
      %159 = vmatpush1.msra.mxu0 0.0
      %160 = vmatprep.subr.mxu0 0.0
      %161 = vmatpush1.msra.mxu0 0.0
      %162 = vmatprep.subr.mxu0 0.0
      %163 = vmatpush1.msra.mxu0 0.0
      %164 = vmatprep.subr.mxu0 0.0
      %165 = vmatpush1.msra.mxu0 0.0
      %166 = vmatprep.subr.mxu0 0.0
      %167 = vmatpush1.msra.mxu0 0.0
      %168 = vmatprep.subr.mxu0 0.0
      %169 = vmatpush1.msra.mxu0 0.0
      %170 = vmatprep.subr.mxu0 0.0
      %171 = vmatpush1.msra.mxu0 0.0
      %172 = vmatprep.subr.mxu0 0.0
      %173 = vmatpush1.msra.mxu0 0.0
      %174 = vmatprep.subr.mxu0 0.0
      %175 = vmatpush1.msra.mxu0 0.0
      %176 = vmatprep.subr.mxu0 0.0
      %177 = vmatpush1.msra.mxu0 0.0
      %178 = vmatprep.subr.mxu0 0.0
      %179 = vmatpush1.msra.mxu0 0.0
      %180 = vmatprep.subr.mxu0 0.0
      %181 = vmatpush1.msra.mxu0 0.0
      %182 = vmatprep.subr.mxu0 0.0
      %183 = vmatpush1.msra.mxu0 0.0
      %184 = vmatprep.subr.mxu0 0.0
      %185 = vmatpush1.msra.mxu0 0.0
      %186 = vmatprep.subr.mxu0 0.0
      %187 = vmatpush1.msra.mxu0 0.0
      %188 = vmatprep.mubr.f32.mxu0 0.0
      %189 = vmatmul.mubr.f32.gmra.mrb[0].mxu0 %v119
      %v190 = vpop.f32.mrb[0].mxu0
      %v191 = vadd.f32 %v115, %v190
      %v192 = vpop.f32.mrb[0].mxu0
      %193 = vdwg.mxu0
      %v194 = vmax.f32 %v191, 0.0
      %v195 = vld [vmem:[#allocation8] sm:$0xff]
      %v196 = vld [vmem:[#allocation8 + $0x8] sm:$0xff]
      %v197 = vld [vmem:[#allocation8 + $0x10] sm:$0xff]
      %v198 = vld [vmem:[#allocation8 + $0x18] sm:$0xff]
      %v199 = vld [vmem:[#allocation8 + $0x20] sm:$0xff]
      %v200 = vld [vmem:[#allocation8 + $0x28] sm:$0xff]
      %v201 = vld [vmem:[#allocation8 + $0x30] sm:$0xff]
      %v202 = vld [vmem:[#allocation8 + $0x38] sm:$0xff]
      %v203 = vld [vmem:[#allocation8 + $0x40] sm:$0xff]
      %v204 = vld [vmem:[#allocation8 + $0x48] sm:$0xff]
      %v205 = vld [vmem:[#allocation8 + $0x50] sm:$0xff]
      %v206 = vld [vmem:[#allocation8 + $0x58] sm:$0xff]
      %v207 = vld [vmem:[#allocation8 + $0x60] sm:$0xff]
      %v208 = vld [vmem:[#allocation8 + $0x68] sm:$0xff]
      %v209 = vld [vmem:[#allocation8 + $0x70] sm:$0xff]
      %v210 = vld [vmem:[#allocation8 + $0x78] sm:$0xff]
      %v211 = vld [vmem:[%s4] sm:$0x1]
      %v213 = vlaneseq
      %v214 = vshrl.u32 %v213, 7
      %v215 = vsub.s32 0, %v214
      %v216 = vrot.slane %v211, %v215
      %218 = vmatprep.subr.mxu0 0.0
      %219 = vmatpush1.msra.mxu0 %v195
      %220 = vmatprep.subr.mxu0 0.0
      %221 = vmatpush1.msra.mxu0 %v196
      %222 = vmatprep.subr.mxu0 0.0
      %223 = vmatpush1.msra.mxu0 %v197
      %224 = vmatprep.subr.mxu0 0.0
      %225 = vmatpush1.msra.mxu0 %v198
      %226 = vmatprep.subr.mxu0 0.0
      %227 = vmatpush1.msra.mxu0 %v199
      %228 = vmatprep.subr.mxu0 0.0
      %229 = vmatpush1.msra.mxu0 %v200
      %230 = vmatprep.subr.mxu0 0.0
      %231 = vmatpush1.msra.mxu0 %v201
      %232 = vmatprep.subr.mxu0 0.0
      %233 = vmatpush1.msra.mxu0 %v202
      %234 = vmatprep.subr.mxu0 0.0
      %235 = vmatpush1.msra.mxu0 %v203
      %236 = vmatprep.subr.mxu0 0.0
      %237 = vmatpush1.msra.mxu0 %v204
      %238 = vmatprep.subr.mxu0 0.0
      %239 = vmatpush1.msra.mxu0 %v205
      %240 = vmatprep.subr.mxu0 0.0
      %241 = vmatpush1.msra.mxu0 %v206
      %242 = vmatprep.subr.mxu0 0.0
      %243 = vmatpush1.msra.mxu0 %v207
      %244 = vmatprep.subr.mxu0 0.0
      %245 = vmatpush1.msra.mxu0 %v208
      %246 = vmatprep.subr.mxu0 0.0
      %247 = vmatpush1.msra.mxu0 %v209
      %248 = vmatprep.subr.mxu0 0.0
      %249 = vmatpush1.msra.mxu0 %v210
      %250 = vmatprep.subr.mxu0 0.0
      %251 = vmatpush1.msra.mxu0 0.0
      %252 = vmatprep.subr.mxu0 0.0
      %253 = vmatpush1.msra.mxu0 0.0
      %254 = vmatprep.subr.mxu0 0.0
      %255 = vmatpush1.msra.mxu0 0.0
      %256 = vmatprep.subr.mxu0 0.0
      %257 = vmatpush1.msra.mxu0 0.0
      %258 = vmatprep.subr.mxu0 0.0
      %259 = vmatpush1.msra.mxu0 0.0
      %260 = vmatprep.subr.mxu0 0.0
      %261 = vmatpush1.msra.mxu0 0.0
      %262 = vmatprep.subr.mxu0 0.0
      %263 = vmatpush1.msra.mxu0 0.0
      %264 = vmatprep.subr.mxu0 0.0
      %265 = vmatpush1.msra.mxu0 0.0
      %266 = vmatprep.subr.mxu0 0.0
      %267 = vmatpush1.msra.mxu0 0.0
      %268 = vmatprep.subr.mxu0 0.0
      %269 = vmatpush1.msra.mxu0 0.0
      %270 = vmatprep.subr.mxu0 0.0
      %271 = vmatpush1.msra.mxu0 0.0
      %272 = vmatprep.subr.mxu0 0.0
      %273 = vmatpush1.msra.mxu0 0.0
      %274 = vmatprep.subr.mxu0 0.0
      %275 = vmatpush1.msra.mxu0 0.0
      %276 = vmatprep.subr.mxu0 0.0
      %277 = vmatpush1.msra.mxu0 0.0
      %278 = vmatprep.subr.mxu0 0.0
      %279 = vmatpush1.msra.mxu0 0.0
      %280 = vmatprep.subr.mxu0 0.0
      %281 = vmatpush1.msra.mxu0 0.0
      %282 = vmatprep.mubr.f32.mxu0 0.0
      %283 = vmatmul.mubr.f32.gmra.mrb[0].mxu0 %v194
      %v284 = vpop.f32.mrb[0].mxu0
      %v285 = vadd.f32 %v216, %v284
      %v286 = vpop.f32.mrb[0].mxu0
      %287 = vdwg.mxu0
      %288 = vst [vmem:[#allocation9] sm:$0x3] %v285
    $region41: #{tpu_custom_call.1} parent=1 // pred_fallthru
      _
    // Predicated region
    $region42: #{tpu_custom_call.1} parent=1 // pred_check
      _
    $region43: #{tpu_custom_call.1} parent=1 // pred_check_branch
      %290 = sbr.rel (0) target = $region45
    $region44: #{tpu_custom_call.1} parent=1 // pred_region
      %s292 = ssub.s32 32, 32
      %293 = vsyncadd [#allocation5], %s292
      %s295 = sshll.u32 [#allocation9], 4
      %s296 = int_to_ptr.vmem [resolvable:$true] %s295
      %298 = dma.vmem_to_hbm [thread:$0]  %s296, 32, %s5, [#allocation5]
    $region45: #{tpu_custom_call.1} parent=1 // pred_fallthru
      _
    // Predicated region
    $region46: #{tpu_custom_call.1} parent=1 // pred_check
      _
    $region47: #{tpu_custom_call.1} parent=1 // pred_check_branch
      %300 = sbr.rel (0) target = $region49
    $region48: #{tpu_custom_call.1} parent=1 // pred_region
      %301 = dma.done [#allocation5], 32
    $region49: #{tpu_custom_call.1} parent=1 // pred_fallthru
      _
    %302 = vsyncpa [#allocation4], 1
    %303 = vsyncpa [#allocation7], 1
    %304 = vsyncpa [#allocation5], 1

</llo_original>
